<compile_context>
chip_gen: v6e
topology: v6e:2x2x1
jax: 0.10.0
libtpu: 0.0.40
codegen_flags: <defaults>
</compile_context>

<pallas_src>
import functools
import re

import jax
import jax.numpy as jnp
from jax.experimental import pallas as pl
from jax.experimental.pallas import tpu as pltpu


def _causal_maxpool_kernel(x_ref, o_ref, *, kernel_size, dilation, compute_dtype):
    """Stride-1 causal max over the length (lane) axis for one row tile."""
    x = x_ref[...]                                   # (TR, L)
    if x.dtype != compute_dtype:
        x = x.astype(compute_dtype)
    rows, l = x.shape

    if kernel_size == 1:
        o_ref[...] = x.astype(o_ref.dtype)
        return

    # Roll-based taps need the lane dim to be 128-aligned for Mosaic's
    # dynamic-rotate; otherwise use contiguous slices (always supported).
    use_roll = (l % 128 == 0)
    lane = jax.lax.broadcasted_iota(jnp.int32, (1, l), 1) if use_roll else None

    def shifted(v, s):
        """out[t] = v[t - s] for t >= s, else 0 (the causal zero padding)."""
        if s <= 0:
            return v
        if s >= l:
            return jnp.zeros_like(v)                 # tap entirely in the padding
        if use_roll:
            # XLU lane rotation + VPU select; no padded VMEM copy.
            return jnp.where(lane >= s, pltpu.roll(v, shift=s, axis=1), 0)
        # Non-128-aligned L: small zero block + contiguous lane slice.
        return jnp.concatenate(
            [jnp.zeros((rows, s), v.dtype), v[:, : l - s]], axis=1)

    if kernel_size >= 8:
        # Two-overlapping-power-of-2-windows trick: doubling running maxes,
        # then combine the largest window with a shifted copy of itself.
        m, w = x, 1
        while 2 * w <= kernel_size:
            m = jnp.maximum(m, shifted(m, w * dilation))
            w *= 2
        if w == kernel_size:
            out = m
        else:
            out = jnp.maximum(m, shifted(m, (kernel_size - w) * dilation))
    else:
        # Small K: direct running max over the K-1 shifted taps.
        out = x
        for j in range(1, kernel_size):
            out = jnp.maximum(out, shifted(x, j * dilation))

    o_ref[...] = out.astype(o_ref.dtype)


def _tpu_info():
    """Returns (tpu_generation or None, physical per-core VMEM bytes)."""
    gen = None
    try:
        kind = jax.devices()[0].device_kind
        m = re.search(r"(\d+)", kind)
        if m:
            gen = int(m.group(1))
    except Exception:
        pass
    vmem_cap = None
    try:
        vmem_cap = int(pltpu.get_tpu_info().vmem_capacity_bytes)
    except Exception:
        vmem_cap = None
    if vmem_cap is None or vmem_cap <= 0:
        # v7x has 64 MiB per TensorCore; v5e/v6e have 128 MiB.  Be conservative
        # when the generation is unknown.
        vmem_cap = (128 << 20) if (gen is not None and gen <= 6) else (64 << 20)
    return gen, vmem_cap


def _compute_dtype(dtype, gen):
    d = jnp.dtype(dtype)
    if d == jnp.dtype(jnp.bfloat16) and gen is not None and gen >= 6:
        return jnp.bfloat16                          # bf16 VALU exists; max is exact
    if jnp.issubdtype(d, jnp.floating):
        return jnp.float32                           # v5e has no bf16 VALU
    return d                                         # integer max is exact natively


def _row_tile(nc, l, in_dtype, compute_dtype, vmem_cap):
    """Row tile: multiple of the sublane packing, sized by a VMEM byte budget."""
    in_item = jnp.dtype(in_dtype).itemsize
    c_item = jnp.dtype(compute_dtype).itemsize
    min_rows = max(8, 32 // in_item)                 # 8 f32 / 16 bf16 / 32 int8
    if nc <= min_rows:
        return nc
    # Per-row VMEM: double-buffered input + output blocks + live compute temps.
    per_row = 4 * l * in_item + l * (3 * c_item + 4)
    budget = min(int(vmem_cap * 0.40), 56 << 20)
    tr = min(nc, budget // max(per_row, 1))
    if tr >= nc:
        # Keep >= 2 grid steps where possible so v7x's two TensorCores both
        # get work (cheap on v5e/v6e: ~0.35 us extra per step).
        tr = (nc + 1) // 2
    tr = max(min_rows, (tr // min_rows) * min_rows)
    return min(tr, nc)


def causal_max_pool1d(x, kernel_size, stride=1, dilation=1):
    """x: (N, C, L) array.  Returns (N, C, L_out) with PyTorch CausalMaxPool1d semantics."""
    n, c, l = x.shape
    l_out = (l - 1) // stride + 1
    nc = n * c
    x2 = x.reshape(nc, l)                            # layout-only reshape

    gen, vmem_cap = _tpu_info()
    compute_dtype = _compute_dtype(x.dtype, gen)
    tr = _row_tile(nc, l, x.dtype, compute_dtype, vmem_cap)
    grid = (pl.cdiv(nc, tr),)

    kernel = functools.partial(
        _causal_maxpool_kernel,
        kernel_size=kernel_size, dilation=dilation, compute_dtype=compute_dtype)

    out_full = pl.pallas_call(
        kernel,
        out_shape=jax.ShapeDtypeStruct((nc, l), x.dtype),
        grid=grid,
        in_specs=[pl.BlockSpec((tr, l), lambda i: (i, 0))],
        out_specs=pl.BlockSpec((tr, l), lambda i: (i, 0)),
        compiler_params=pltpu.CompilerParams(
            dimension_semantics=("parallel",),
            vmem_limit_bytes=int(vmem_cap * 0.8),
        ),
    )(x2)

    if stride > 1:
        # TODO(synk): fold into the kernel once Mosaic supports lane-strided
        # loads/stores; for now this is one XLA strided-slice pass.
        out_full = out_full[:, ::stride]             # (nc, l_out)

    return out_full.reshape(n, c, l_out)


def _reference(x, kernel_size, stride=1, dilation=1):
    """Pure-JAX reference mirroring the PyTorch module."""
    pad_left = (kernel_size - 1) * dilation
    xp = jnp.pad(x, ((0, 0), (0, 0), (pad_left, 0)))
    l_pad = xp.shape[-1]
    l_out = (l_pad - dilation * (kernel_size - 1) - 1) // stride + 1
    taps = [
        xp[:, :, j * dilation: j * dilation + (l_out - 1) * stride + 1: stride]
        for j in range(kernel_size)
    ]
    return functools.reduce(jnp.maximum, taps)


if __name__ == "__main__":
    key = jax.random.PRNGKey(0)
    k1, k2, k3 = jax.random.split(key, 3)
    x_small = jax.random.normal(k1, (2, 4, 16), dtype=jnp.float32)    # short, non-128 L
    x_odd = jax.random.normal(k2, (3, 5, 37), dtype=jnp.float32)      # odd rows/L -> partial blocks
    x_lane = jax.random.normal(k3, (2, 4, 128), dtype=jnp.float32)    # 128-aligned L -> roll path
    x_bf16 = x_lane.astype(jnp.bfloat16)

    cases = [
        (x_small, 3, 1, 1),
        (x_small, 4, 1, 2),
        (x_odd, 3, 2, 1),    # stride > 1 (wrapper decimation)
        (x_odd, 5, 1, 3),
        (x_lane, 3, 1, 1),   # pltpu.roll tap path
        (x_lane, 9, 1, 2),   # log2-doubling tap path
        (x_bf16, 5, 1, 1),   # bf16 storage / compute path
    ]
    for x, ks, st, dl in cases:
        out = jax.block_until_ready(causal_max_pool1d(x, ks, stride=st, dilation=dl))
        ref = _reference(x, ks, stride=st, dilation=dl)
        assert out.shape == ref.shape, (ks, st, dl, out.shape, ref.shape)
        assert jnp.allclose(out, ref), (
            f"mismatch: ks={ks} st={st} dl={dl} dtype={x.dtype}")

    print("KERNEL_OK")
</pallas_src>

<mosaic_0001>
module attributes {stable_mosaic.version = 11 : i64} {
  func.func @_causal_maxpool_kernel(%arg0: i32, %arg1: memref<8x16xf32, #tpu.memory_space<vmem>>, %arg2: memref<8x16xf32, #tpu.memory_space<vmem>>) attributes {dimension_semantics = [#tpu.dimension_semantics<parallel>], iteration_bounds = array<i64: 1>, scalar_prefetch = 0 : i64, scratch_operands = 0 : i64, tpu.core_type = #tpu.core_type<tc>, window_params = [{transform_indices = @transform_0, window_bounds = array<i64: 8, 16>}, {transform_indices = @transform_1, window_bounds = array<i64: 8, 16>}]} {
    %c0 = arith.constant 0 : index
    %c0_0 = arith.constant 0 : index
    %0 = vector.load %arg1[%c0, %c0_0] : memref<8x16xf32, #tpu.memory_space<vmem>>, vector<8x16xf32>
    %cst = arith.constant 0.000000e+00 : f32
    %1 = vector.broadcast %cst : f32 to vector<8x1xf32>
    %2 = vector.extract_strided_slice %0 {offsets = [0, 0], sizes = [8, 15], strides = [1, 1]} : vector<8x16xf32> to vector<8x15xf32>
    %3 = tpu.concatenate %1, %2 in 1 : vector<8x1xf32>, vector<8x15xf32> -> vector<8x16xf32>
    %4 = arith.maximumf %0, %3 : vector<8x16xf32>
    %cst_1 = arith.constant 0.000000e+00 : f32
    %5 = vector.broadcast %cst_1 : f32 to vector<8x2xf32>
    %6 = vector.extract_strided_slice %0 {offsets = [0, 0], sizes = [8, 14], strides = [1, 1]} : vector<8x16xf32> to vector<8x14xf32>
    %7 = tpu.concatenate %5, %6 in 1 : vector<8x2xf32>, vector<8x14xf32> -> vector<8x16xf32>
    %8 = arith.maximumf %4, %7 : vector<8x16xf32>
    %c0_2 = arith.constant 0 : index
    %c0_3 = arith.constant 0 : index
    %9 = vector.load %arg2[%c0_2, %c0_3] : memref<8x16xf32, #tpu.memory_space<vmem>>, vector<8x16xf32>
    tpu.vector_store %arg2[%c0_2, %c0_3], %8 {strides = array<i32>} : memref<8x16xf32, #tpu.memory_space<vmem>>, vector<8x16xf32>,
    return
  }
  func.func @transform_0(%arg0: i32) -> (i32, i32) {
    %c0_i32 = arith.constant 0 : i32
    %c0_i32_0 = arith.constant 0 : i32
    return %arg0, %c0_i32 : i32, i32
  }
  func.func @transform_1(%arg0: i32) -> (i32, i32) {
    %c0_i32 = arith.constant 0 : i32
    %c0_i32_0 = arith.constant 0 : i32
    return %arg0, %c0_i32 : i32, i32
  }
}

</mosaic_0001>

<llo_original>
// kernel: tpu_custom_call.1
$region0: #{tpu_custom_call.1}
  #allocation0 [shape = 'u32[]', space=smem, size = 0x4, offset = 0x4, fixed_abs, tag = 'smem constant byte address 0x4 - core index']
  #allocation1 [shape = 'u32[144,128]{1,0:T(1,128)}', space=vmem, size = 0x12000, scoped, tag = 'internal scratch']
  %s0 = inlined_call_operand.hbm [shape: f32[8,16], index: 0, kind: input, shape index: {}]
  %s1 = inlined_call_operand.hbm [shape: f32[8,16], index: 1, kind: output, shape index: {}]
  %s2 = sld [smem:[#allocation0]]
  $region18: #{tpu_custom_call.1} parent=0
    _
  %s4 = ssub.s32 1, %s2
  %s5 = scalar_select 0, %s4, %s2
  $region1: #{tpu_custom_call.1} parent=0
    #allocation2 [shape = 'u8[4096]{0}', space=vmem, size = 0x1000, scoped, tag = 'input window, operand 0, single buffered']
    #allocation3 [shape = 's32[1]{0}', space=sflag, size = 0x4, scoped, tag = 'scoped memory for tpu_custom_call.1']
    #allocation4 [shape = 's32[1]{0}', space=sflag, size = 0x4, scoped, tag = 'scoped memory for tpu_custom_call.1']
    #allocation5 [shape = 'u8[4096]{0}', space=vmem, size = 0x1000, scoped, tag = 'output window, operand 0, single buffered']
    %6 = vsyncpa [#allocation3], 0
    %7 = vsyncpa [#allocation4], 0
    // Predicated region
    $region2: #{tpu_custom_call.1} parent=1 // pred_check
      _
    $region3: #{tpu_custom_call.1} parent=1 // pred_check_branch
      %9 = sbr.rel (0) target = $region5
    $region4: #{tpu_custom_call.1} parent=1 // pred_region
      %s11 = ssub.s32 128, 128
      %12 = vsyncadd [#allocation3], %s11
      %s14 = sshll.u32 [#allocation2], 4
      %s15 = int_to_ptr.vmem [resolvable:$true] %s14
      %17 = dma.hbm_to_vmem [thread:$0]  %s0, 128, %s15, [#allocation3]
    $region5: #{tpu_custom_call.1} parent=1 // pred_fallthru
      _
    // Predicated region
    $region6: #{tpu_custom_call.1} parent=1 // pred_check
      _
    $region7: #{tpu_custom_call.1} parent=1 // pred_check_branch
      %19 = sbr.rel (0) target = $region9
    $region8: #{tpu_custom_call.1} parent=1 // pred_region
      %20 = dma.done [#allocation3], 128
    $region9: #{tpu_custom_call.1} parent=1 // pred_fallthru
      _
    %v21 = vld [vmem:[#allocation2] sm:$0xff]
    %23 = vrot.lane.b32.xlu0 %v21, 1
    %v24 = vpop.permute.xlu0 %23
    %vm26 = vcmask 7168
    %v27 = vsel %vm26, 0.0, %v24
    %v28 = vmax.f32 %v21, %v27
    %29 = vrot.lane.b32.xlu0 %v21, 2
    %v30 = vpop.permute.xlu0 %29
    %vm32 = vcmask 15360
    %v33 = vsel %vm32, 0.0, %v30
    %v34 = vmax.f32 %v28, %v33
    %vm35 = vcmask 130048
    %36 = vst.msk [vmem:[#allocation5] sm:$0xff] %vm35, %v34
    // Predicated region
    $region10: #{tpu_custom_call.1} parent=1 // pred_check
      _
    $region11: #{tpu_custom_call.1} parent=1 // pred_check_branch
      %38 = sbr.rel (0) target = $region13
    $region12: #{tpu_custom_call.1} parent=1 // pred_region
      %s40 = ssub.s32 128, 128
      %41 = vsyncadd [#allocation4], %s40
      %s43 = sshll.u32 [#allocation5], 4
      %s44 = int_to_ptr.vmem [resolvable:$true] %s43
      %46 = dma.vmem_to_hbm [thread:$0]  %s44, 128, %s1, [#allocation4]
    $region13: #{tpu_custom_call.1} parent=1 // pred_fallthru
      _
    // Predicated region
    $region14: #{tpu_custom_call.1} parent=1 // pred_check
      _
    $region15: #{tpu_custom_call.1} parent=1 // pred_check_branch
      %48 = sbr.rel (0) target = $region17
    $region16: #{tpu_custom_call.1} parent=1 // pred_region
      %49 = dma.done [#allocation4], 128
    $region17: #{tpu_custom_call.1} parent=1 // pred_fallthru
      _
    %50 = vsyncpa [#allocation3], 1
    %51 = vsyncpa [#allocation4], 1

</llo_original>
